<compile_context>
chip_gen: v7x
topology: tpu7x:2x2x1
jax: 0.10.0
libtpu: 0.0.40
codegen_flags: <defaults>
</compile_context>

<pallas_src>
import functools

import jax
import jax.numpy as jnp
from jax.experimental import pallas as pl
from jax.experimental.pallas import tpu as pltpu

IGNORE_INDEX = -100
_DEFAULT_MAX_BLOCK_N = 8192  # rows (lanes) per grid step; multiple of 128


# ----------------------------------------------------------------------------
# Fused kernel: aspect CE + opinion CE (ignore_index) + sentiment focal loss
# ----------------------------------------------------------------------------
@functools.lru_cache(maxsize=None)
def _make_fused_kernel(n, tn, c_span, c_sent, b_sent, gamma):
    """n: total span rows, tn: rows per tile, c_span/c_sent: class counts,
    b_sent: sentiment batch size, gamma: focal gamma (static)."""

    def _ce_tile(logits_ref, labels_ref, pid):
        # logits_ref block: (c_span, tn); labels_ref block: (1, tn)
        rows = [logits_ref[ci:ci + 1, :].astype(jnp.float32)
                for ci in range(c_span)]                      # each (1, tn)
        m = rows[0]
        for r in rows[1:]:
            m = jnp.maximum(m, r)
        e = jnp.exp(rows[0] - m)
        for r in rows[1:]:
            e = e + jnp.exp(r - m)
        lse = jnp.log(e) + m                                  # (1, tn)

        lab = labels_ref[...]                                 # (1, tn) int32
        logit_t = rows[c_span - 1]
        for ci in range(c_span - 2, -1, -1):
            logit_t = jnp.where(lab == ci, rows[ci], logit_t)
        ce = lse - logit_t                                    # (1, tn)

        # mask: ignore_index labels and the ragged tail of the last tile
        lane = jax.lax.broadcasted_iota(jnp.int32, (1, tn), 1)
        pos = pid * tn + lane
        valid = jnp.logical_and(lab != IGNORE_INDEX, pos < n)
        ce_sum = jnp.sum(jnp.where(valid, ce, 0.0))
        cnt = jnp.sum(valid.astype(jnp.float32))
        return ce_sum, cnt

    def kernel(asp_ref, asp_lab_ref, op_ref, op_lab_ref,
               sent_ref, sent_lab_ref, out_ref, acc_ref):
        pid = pl.program_id(0)

        @pl.when(pid == 0)
        def _init():
            for j in range(8):
                acc_ref[0, j] = jnp.float32(0.0)

            # sentiment focal loss (tiny (c_sent, b_sent) block, computed once)
            srows = [sent_ref[ci:ci + 1, :].astype(jnp.float32)
                     for ci in range(c_sent)]                 # each (1, b_sent)
            m = srows[0]
            for r in srows[1:]:
                m = jnp.maximum(m, r)
            e = jnp.exp(srows[0] - m)
            for r in srows[1:]:
                e = e + jnp.exp(r - m)
            lse = jnp.log(e) + m
            slab = sent_lab_ref[...]                          # (1, b_sent)
            logit_t = srows[c_sent - 1]
            for ci in range(c_sent - 2, -1, -1):
                logit_t = jnp.where(slab == ci, srows[ci], logit_t)
            ce = lse - logit_t                                # (1, b_sent)
            pt = jnp.exp(-ce)
            one_minus_pt = jnp.maximum(1.0 - pt, 0.0)         # NaN-safe base
            if gamma == 2.0:
                mod = one_minus_pt * one_minus_pt             # VALU, not pow
            else:
                mod = one_minus_pt ** gamma
            acc_ref[0, 4] = jnp.sum(mod * ce)

        # per-tile partial sums for the two span CE losses
        a_sum, a_cnt = _ce_tile(asp_ref, asp_lab_ref, pid)
        o_sum, o_cnt = _ce_tile(op_ref, op_lab_ref, pid)
        acc_ref[0, 0] += a_sum
        acc_ref[0, 1] += a_cnt
        acc_ref[0, 2] += o_sum
        acc_ref[0, 3] += o_cnt

        @pl.when(pid == pl.num_programs(0) - 1)
        def _finalize():
            # NOTE: all-ignored labels give 0 here (torch CE would give NaN).
            asp_loss = acc_ref[0, 0] / jnp.maximum(acc_ref[0, 1], 1.0)
            op_loss = acc_ref[0, 2] / jnp.maximum(acc_ref[0, 3], 1.0)
            sent_loss = acc_ref[0, 4] / jnp.float32(b_sent)
            out_ref[0, 0] = asp_loss
            out_ref[0, 1] = op_loss
            out_ref[0, 2] = sent_loss

    return kernel


def _fused_absa_losses(asp_t, asp_lab, op_t, op_lab, sent_t, sent_lab,
                       *, gamma, max_block_n):
    """Inputs (lane-dense): asp_t/op_t (3, N), asp_lab/op_lab (1, N) int32,
    sent_t (C_sent, B), sent_lab (1, B) int32.  Returns (1, 3) f32 losses."""
    c_span, n = asp_t.shape
    c_sent, b_sent = sent_t.shape

    tn = n if n <= max_block_n else max_block_n
    num_tiles = pl.cdiv(n, tn)

    kernel = _make_fused_kernel(n, tn, c_span, c_sent, b_sent, float(gamma))

    grid_spec = pltpu.PrefetchScalarGridSpec(
        num_scalar_prefetch=0,
        grid=(num_tiles,),
        in_specs=[
            pl.BlockSpec((c_span, tn), lambda i: (0, i)),      # aspect logits
            pl.BlockSpec((1, tn), lambda i: (0, i)),           # aspect labels
            pl.BlockSpec((c_span, tn), lambda i: (0, i)),      # opinion logits
            pl.BlockSpec((1, tn), lambda i: (0, i)),           # opinion labels
            pl.BlockSpec((c_sent, b_sent), lambda i: (0, 0)),  # sentiment logits
            pl.BlockSpec((1, b_sent), lambda i: (0, 0)),       # sentiment labels
        ],
        out_specs=pl.BlockSpec(memory_space=pltpu.MemorySpace.SMEM),
        scratch_shapes=[pltpu.SMEM((1, 8), jnp.float32)],
    )

    return pl.pallas_call(
        kernel,
        out_shape=jax.ShapeDtypeStruct((1, 3), jnp.float32),
        grid_spec=grid_spec,
        compiler_params=pltpu.CompilerParams(
            dimension_semantics=("arbitrary",),
            vmem_limit_bytes=32 * 1024 * 1024,
        ),
    )(asp_t, asp_lab, op_t, op_lab, sent_t, sent_lab)


# ----------------------------------------------------------------------------
# Forward (jitted glue; layout plumbing only — all reductions in the kernel)
# ----------------------------------------------------------------------------
def _absa_forward(aspect_logits, opinion_logits, sentiment_logits,
                  aspect_labels, opinion_labels, sentiment_labels,
                  *, aspect_weight, opinion_weight, sentiment_weight,
                  gamma, max_block_n):
    # multi-span collapsing (same semantics as the torch module)
    if aspect_labels.ndim == 3:
        aspect_labels = jnp.max(aspect_labels, axis=1)
    if opinion_labels.ndim == 3:
        opinion_labels = jnp.max(opinion_labels, axis=1)
    if sentiment_labels.ndim == 2:
        sentiment_labels = sentiment_labels[:, 0]

    # lane-dense layout: class dim -> sublanes, flattened B*S -> lanes
    asp_t = aspect_logits.reshape(-1, 3).T                     # (3, N), native dtype
    op_t = opinion_logits.reshape(-1, 3).T                     # (3, N)
    asp_lab = aspect_labels.reshape(1, -1).astype(jnp.int32)   # (1, N)
    op_lab = opinion_labels.reshape(1, -1).astype(jnp.int32)   # (1, N)
    sent_t = sentiment_logits.T                                # (C_sent, B)
    sent_lab = sentiment_labels.reshape(1, -1).astype(jnp.int32)

    losses = _fused_absa_losses(asp_t, asp_lab, op_t, op_lab, sent_t, sent_lab,
                                gamma=gamma, max_block_n=max_block_n)
    aspect_loss = losses[0, 0]
    opinion_loss = losses[0, 1]
    sentiment_loss = losses[0, 2]
    total_loss = (aspect_weight * aspect_loss
                  + opinion_weight * opinion_loss
                  + sentiment_weight * sentiment_loss)
    return {
        'loss': total_loss,
        'aspect_loss': aspect_loss,
        'opinion_loss': opinion_loss,
        'sentiment_loss': sentiment_loss,
    }
    # TODO(synk): optional generation CE branch (outputs['explanations']) is
    # not exercised in the default forward path and is omitted.


class ABSALossPallas:
    def __init__(self, aspect_loss_weight=1.0, opinion_loss_weight=1.0,
                 sentiment_loss_weight=1.0, gamma=2.0,
                 max_block_n=_DEFAULT_MAX_BLOCK_N):
        self._forward = jax.jit(functools.partial(
            _absa_forward,
            aspect_weight=float(aspect_loss_weight),
            opinion_weight=float(opinion_loss_weight),
            sentiment_weight=float(sentiment_loss_weight),
            gamma=float(gamma),
            max_block_n=int(max_block_n)))

    def __call__(self, outputs, targets):
        return self._forward(
            outputs['aspect_logits'], outputs['opinion_logits'],
            outputs['sentiment_logits'],
            targets['aspect_labels'], targets['opinion_labels'],
            targets['sentiment_labels'])


# ----------------------------------------------------------------------------
# Pure-JAX reference (correctness check only)
# ----------------------------------------------------------------------------
def _ref_masked_ce(logits, labels):
    logits = logits.astype(jnp.float32)
    lse = jax.nn.logsumexp(logits, axis=-1)
    safe = jnp.where(labels == IGNORE_INDEX, 0, labels)
    logit_t = jnp.take_along_axis(logits, safe[:, None], axis=-1)[:, 0]
    ce = lse - logit_t
    valid = (labels != IGNORE_INDEX).astype(jnp.float32)
    return jnp.sum(ce * valid) / jnp.maximum(jnp.sum(valid), 1.0)


def _ref_focal(logits, labels, gamma=2.0):
    logits = logits.astype(jnp.float32)
    lse = jax.nn.logsumexp(logits, axis=-1)
    logit_t = jnp.take_along_axis(logits, labels[:, None], axis=-1)[:, 0]
    ce = lse - logit_t
    pt = jnp.exp(-ce)
    return jnp.mean(((1.0 - pt) ** gamma) * ce)


def _check_case(key, B, S, C_SPAN, C_SENT, max_block_n):
    k1, k2, k3, k4, k5, k6 = jax.random.split(key, 6)
    aspect_logits = jax.random.normal(k1, (B, S, C_SPAN), dtype=jnp.float32)
    opinion_logits = jax.random.normal(k2, (B, S, C_SPAN), dtype=jnp.float32)
    sentiment_logits = jax.random.normal(k3, (B, C_SENT), dtype=jnp.float32)
    aspect_labels = jax.random.randint(k4, (B, S), 0, C_SPAN, dtype=jnp.int32)
    opinion_labels = jax.random.randint(k5, (B, S), 0, C_SPAN, dtype=jnp.int32)
    aspect_labels = aspect_labels.at[:, -3:].set(IGNORE_INDEX)
    opinion_labels = opinion_labels.at[:, -2:].set(IGNORE_INDEX)
    sentiment_labels = jax.random.randint(k6, (B,), 0, C_SENT, dtype=jnp.int32)

    outputs = {'aspect_logits': aspect_logits,
               'opinion_logits': opinion_logits,
               'sentiment_logits': sentiment_logits}
    targets = {'aspect_labels': aspect_labels,
               'opinion_labels': opinion_labels,
               'sentiment_labels': sentiment_labels}

    loss_fn = ABSALossPallas(1.0, 1.0, 1.0, max_block_n=max_block_n)
    result = loss_fn(outputs, targets)
    jax.block_until_ready(result['loss'])

    ref_aspect = _ref_masked_ce(aspect_logits.reshape(-1, C_SPAN),
                                aspect_labels.reshape(-1))
    ref_opinion = _ref_masked_ce(opinion_logits.reshape(-1, C_SPAN),
                                 opinion_labels.reshape(-1))
    ref_sentiment = _ref_focal(sentiment_logits, sentiment_labels, 2.0)
    ref_total = ref_aspect + ref_opinion + ref_sentiment

    assert jnp.allclose(result['aspect_loss'], ref_aspect, atol=1e-5, rtol=1e-5)
    assert jnp.allclose(result['opinion_loss'], ref_opinion, atol=1e-5, rtol=1e-5)
    assert jnp.allclose(result['sentiment_loss'], ref_sentiment, atol=1e-5, rtol=1e-5)
    assert jnp.allclose(result['loss'], ref_total, atol=1e-5, rtol=1e-5)


if __name__ == "__main__":
    key = jax.random.PRNGKey(0)
    k_a, k_b = jax.random.split(key)

    # small case (single tile): B=2, S=16, 3 span classes, 3 sentiment classes
    _check_case(k_a, B=2, S=16, C_SPAN=3, C_SENT=3,
                max_block_n=_DEFAULT_MAX_BLOCK_N)

    # multi-tile + ragged last tile case: N = 4*80 = 320 rows, 128-row tiles
    _check_case(k_b, B=4, S=80, C_SPAN=3, C_SENT=3, max_block_n=128)

    print("KERNEL_OK")
</pallas_src>

<mosaic_0001>
module attributes {stable_mosaic.version = 11 : i64} {
  func.func @kernel(%arg0: i32, %arg1: memref<3x32xf32, #tpu.memory_space<vmem>>, %arg2: memref<1x32xi32, #tpu.memory_space<vmem>>, %arg3: memref<3x32xf32, #tpu.memory_space<vmem>>, %arg4: memref<1x32xi32, #tpu.memory_space<vmem>>, %arg5: memref<3x2xf32, #tpu.memory_space<vmem>>, %arg6: memref<1x2xi32, #tpu.memory_space<vmem>>, %arg7: memref<1x3xf32, #tpu.memory_space<smem>>, %arg8: memref<1x8xf32, #tpu.memory_space<smem>>) attributes {dimension_semantics = [#tpu.dimension_semantics<arbitrary>], iteration_bounds = array<i64: 1>, scalar_prefetch = 0 : i64, scratch_operands = 1 : i64, tpu.core_type = #tpu.core_type<tc>, window_params = [{transform_indices = @transform_0, window_bounds = array<i64: 3, 32>}, {transform_indices = @transform_1, window_bounds = array<i64: 1, 32>}, {transform_indices = @transform_2, window_bounds = array<i64: 3, 32>}, {transform_indices = @transform_3, window_bounds = array<i64: 1, 32>}, {pipeline_mode = #tpu.pipeline_mode<synchronous>, transform_indices = @transform_4, window_bounds = array<i64: 3, 2>}, {pipeline_mode = #tpu.pipeline_mode<synchronous>, transform_indices = @transform_5, window_bounds = array<i64: 1, 2>}, {transform_indices = @transform_6, window_bounds = array<i64: 1, 3>}]} {
    %c0_i32 = arith.constant 0 : i32
    %0 = arith.cmpi eq, %arg0, %c0_i32 : i32
    %1 = arith.extui %0 : i1 to i32
    %c0_i32_0 = arith.constant 0 : i32
    %2 = arith.cmpi ne, %1, %c0_i32_0 : i32
    scf.if %2 {
      %cst_43 = arith.constant 0.000000e+00 : f32
      %c0_44 = arith.constant 0 : index
      %c0_45 = arith.constant 0 : index
      %106 = memref.load %arg8[%c0_44, %c0_45] : memref<1x8xf32, #tpu.memory_space<smem>>
      memref.store %cst_43, %arg8[%c0_44, %c0_45] : memref<1x8xf32, #tpu.memory_space<smem>>
      %cst_46 = arith.constant 0.000000e+00 : f32
      %c0_47 = arith.constant 0 : index
      %c1_48 = arith.constant 1 : index
      %107 = memref.load %arg8[%c0_47, %c1_48] : memref<1x8xf32, #tpu.memory_space<smem>>
      memref.store %cst_46, %arg8[%c0_47, %c1_48] : memref<1x8xf32, #tpu.memory_space<smem>>
      %cst_49 = arith.constant 0.000000e+00 : f32
      %c0_50 = arith.constant 0 : index
      %c2_51 = arith.constant 2 : index
      %108 = memref.load %arg8[%c0_50, %c2_51] : memref<1x8xf32, #tpu.memory_space<smem>>
      memref.store %cst_49, %arg8[%c0_50, %c2_51] : memref<1x8xf32, #tpu.memory_space<smem>>
      %cst_52 = arith.constant 0.000000e+00 : f32
      %c0_53 = arith.constant 0 : index
      %c3_54 = arith.constant 3 : index
      %109 = memref.load %arg8[%c0_53, %c3_54] : memref<1x8xf32, #tpu.memory_space<smem>>
      memref.store %cst_52, %arg8[%c0_53, %c3_54] : memref<1x8xf32, #tpu.memory_space<smem>>
      %cst_55 = arith.constant 0.000000e+00 : f32
      %c0_56 = arith.constant 0 : index
      %c4 = arith.constant 4 : index
      %110 = memref.load %arg8[%c0_56, %c4] : memref<1x8xf32, #tpu.memory_space<smem>>
      memref.store %cst_55, %arg8[%c0_56, %c4] : memref<1x8xf32, #tpu.memory_space<smem>>
      %cst_57 = arith.constant 0.000000e+00 : f32
      %c0_58 = arith.constant 0 : index
      %c5 = arith.constant 5 : index
      %111 = memref.load %arg8[%c0_58, %c5] : memref<1x8xf32, #tpu.memory_space<smem>>
      memref.store %cst_57, %arg8[%c0_58, %c5] : memref<1x8xf32, #tpu.memory_space<smem>>
      %cst_59 = arith.constant 0.000000e+00 : f32
      %c0_60 = arith.constant 0 : index
      %c6 = arith.constant 6 : index
      %112 = memref.load %arg8[%c0_60, %c6] : memref<1x8xf32, #tpu.memory_space<smem>>
      memref.store %cst_59, %arg8[%c0_60, %c6] : memref<1x8xf32, #tpu.memory_space<smem>>
      %cst_61 = arith.constant 0.000000e+00 : f32
      %c0_62 = arith.constant 0 : index
      %c7 = arith.constant 7 : index
      %113 = memref.load %arg8[%c0_62, %c7] : memref<1x8xf32, #tpu.memory_space<smem>>
      memref.store %cst_61, %arg8[%c0_62, %c7] : memref<1x8xf32, #tpu.memory_space<smem>>
      %c0_63 = arith.constant 0 : index
      %c0_64 = arith.constant 0 : index
      %114 = vector.load %arg5[%c0_63, %c0_64] : memref<3x2xf32, #tpu.memory_space<vmem>>, vector<1x2xf32>
      %c1_65 = arith.constant 1 : index
      %c0_66 = arith.constant 0 : index
      %115 = vector.load %arg5[%c1_65, %c0_66] : memref<3x2xf32, #tpu.memory_space<vmem>>, vector<1x2xf32>
      %c2_67 = arith.constant 2 : index
      %c0_68 = arith.constant 0 : index
      %116 = vector.load %arg5[%c2_67, %c0_68] : memref<3x2xf32, #tpu.memory_space<vmem>>, vector<1x2xf32>
      %117 = arith.maximumf %114, %115 : vector<1x2xf32>
      %118 = arith.maximumf %117, %116 : vector<1x2xf32>
      %119 = arith.subf %114, %118 : vector<1x2xf32>
      %120 = math.exp %119 : vector<1x2xf32>
      %121 = arith.subf %115, %118 : vector<1x2xf32>
      %122 = math.exp %121 : vector<1x2xf32>
      %123 = arith.addf %120, %122 : vector<1x2xf32>
      %124 = arith.subf %116, %118 : vector<1x2xf32>
      %125 = math.exp %124 : vector<1x2xf32>
      %126 = arith.addf %123, %125 : vector<1x2xf32>
      %127 = math.log %126 : vector<1x2xf32>
      %128 = arith.addf %127, %118 : vector<1x2xf32>
      %c0_69 = arith.constant 0 : index
      %c0_70 = arith.constant 0 : index
      %129 = vector.load %arg6[%c0_69, %c0_70] : memref<1x2xi32, #tpu.memory_space<vmem>>, vector<1x2xi32>
      %c1_i32_71 = arith.constant 1 : i32
      %130 = vector.broadcast %c1_i32_71 : i32 to vector<1x2xi32>
      %131 = arith.cmpi eq, %129, %130 : vector<1x2xi32>
      %132 = arith.select %131, %115, %116 : vector<1x2xi1>, vector<1x2xf32>
      %c0_i32_72 = arith.constant 0 : i32
      %133 = vector.broadcast %c0_i32_72 : i32 to vector<1x2xi32>
      %134 = arith.cmpi eq, %129, %133 : vector<1x2xi32>
      %135 = arith.select %134, %114, %132 : vector<1x2xi1>, vector<1x2xf32>
      %136 = arith.subf %128, %135 : vector<1x2xf32>
      %cst_73 = arith.constant 0.000000e+00 : f32
      %137 = vector.broadcast %cst_73 : f32 to vector<1x2xf32>
      %138 = arith.subf %137, %136 : vector<1x2xf32>
      %139 = math.exp %138 : vector<1x2xf32>
      %cst_74 = arith.constant 1.000000e+00 : f32
      %140 = vector.broadcast %cst_74 : f32 to vector<1x2xf32>
      %141 = arith.subf %140, %139 : vector<1x2xf32>
      %cst_75 = arith.constant 0.000000e+00 : f32
      %142 = vector.broadcast %cst_75 : f32 to vector<1x2xf32>
      %143 = arith.maximumf %141, %142 : vector<1x2xf32>
      %144 = arith.mulf %143, %143 : vector<1x2xf32>
      %145 = arith.mulf %144, %136 : vector<1x2xf32>
      %146 = vector.shape_cast %145 : vector<1x2xf32> to vector<1x1x2xf32>
      %cst_76 = arith.constant dense<0.000000e+00> : vector<1xf32>
      %147 = vector.multi_reduction <add>, %146, %cst_76 [1, 2] : vector<1x1x2xf32> to vector<1xf32>
      %148 = vector.shape_cast %147 : vector<1xf32> to vector<1x1x1xf32>
      %149 = vector.extract %148[0, 0, 0] : f32 from vector<1x1x1xf32>
      %c0_77 = arith.constant 0 : index
      %c4_78 = arith.constant 4 : index
      %150 = memref.load %arg8[%c0_77, %c4_78] : memref<1x8xf32, #tpu.memory_space<smem>>
      memref.store %149, %arg8[%c0_77, %c4_78] : memref<1x8xf32, #tpu.memory_space<smem>>
    } else {
    }
    %c0 = arith.constant 0 : index
    %c0_1 = arith.constant 0 : index
    %3 = vector.load %arg1[%c0, %c0_1] : memref<3x32xf32, #tpu.memory_space<vmem>>, vector<1x32xf32>
    %c1 = arith.constant 1 : index
    %c0_2 = arith.constant 0 : index
    %4 = vector.load %arg1[%c1, %c0_2] : memref<3x32xf32, #tpu.memory_space<vmem>>, vector<1x32xf32>
    %c2 = arith.constant 2 : index
    %c0_3 = arith.constant 0 : index
    %5 = vector.load %arg1[%c2, %c0_3] : memref<3x32xf32, #tpu.memory_space<vmem>>, vector<1x32xf32>
    %6 = arith.maximumf %3, %4 : vector<1x32xf32>
    %7 = arith.maximumf %6, %5 : vector<1x32xf32>
    %8 = arith.subf %3, %7 : vector<1x32xf32>
    %9 = math.exp %8 : vector<1x32xf32>
    %10 = arith.subf %4, %7 : vector<1x32xf32>
    %11 = math.exp %10 : vector<1x32xf32>
    %12 = arith.addf %9, %11 : vector<1x32xf32>
    %13 = arith.subf %5, %7 : vector<1x32xf32>
    %14 = math.exp %13 : vector<1x32xf32>
    %15 = arith.addf %12, %14 : vector<1x32xf32>
    %16 = math.log %15 : vector<1x32xf32>
    %17 = arith.addf %16, %7 : vector<1x32xf32>
    %c0_4 = arith.constant 0 : index
    %c0_5 = arith.constant 0 : index
    %18 = vector.load %arg2[%c0_4, %c0_5] : memref<1x32xi32, #tpu.memory_space<vmem>>, vector<1x32xi32>
    %c1_i32 = arith.constant 1 : i32
    %19 = vector.broadcast %c1_i32 : i32 to vector<1x32xi32>
    %20 = arith.cmpi eq, %18, %19 : vector<1x32xi32>
    %21 = arith.select %20, %4, %5 : vector<1x32xi1>, vector<1x32xf32>
    %c0_i32_6 = arith.constant 0 : i32
    %22 = vector.broadcast %c0_i32_6 : i32 to vector<1x32xi32>
    %23 = arith.cmpi eq, %18, %22 : vector<1x32xi32>
    %24 = arith.select %23, %3, %21 : vector<1x32xi1>, vector<1x32xf32>
    %25 = arith.subf %17, %24 : vector<1x32xf32>
    %26 = tpu.iota {dimensions = array<i32: 1>} : vector<1x32xi32>
    %c32_i32 = arith.constant 32 : i32
    %27 = arith.muli %arg0, %c32_i32 : i32
    %28 = vector.broadcast %27 : i32 to vector<1x32xi32>
    %29 = arith.addi %28, %26 : vector<1x32xi32>
    %c-100_i32 = arith.constant -100 : i32
    %30 = vector.broadcast %c-100_i32 : i32 to vector<1x32xi32>
    %31 = arith.cmpi ne, %18, %30 : vector<1x32xi32>
    %c32_i32_7 = arith.constant 32 : i32
    %32 = vector.broadcast %c32_i32_7 : i32 to vector<1x32xi32>
    %33 = arith.cmpi slt, %29, %32 : vector<1x32xi32>
    %34 = arith.andi %31, %33 : vector<1x32xi1>
    %cst = arith.constant 0.000000e+00 : f32
    %35 = vector.broadcast %cst : f32 to vector<1x32xf32>
    %36 = arith.select %34, %25, %35 : vector<1x32xi1>, vector<1x32xf32>
    %37 = vector.shape_cast %36 : vector<1x32xf32> to vector<1x1x32xf32>
    %cst_8 = arith.constant dense<0.000000e+00> : vector<1xf32>
    %38 = vector.multi_reduction <add>, %37, %cst_8 [1, 2] : vector<1x1x32xf32> to vector<1xf32>
    %39 = vector.shape_cast %38 : vector<1xf32> to vector<1x1x1xf32>
    %40 = vector.extract %39[0, 0, 0] : f32 from vector<1x1x1xf32>
    %41 = arith.extui %34 : vector<1x32xi1> to vector<1x32xi32>
    %42 = arith.sitofp %41 : vector<1x32xi32> to vector<1x32xf32>
    %43 = vector.shape_cast %42 : vector<1x32xf32> to vector<1x1x32xf32>
    %cst_9 = arith.constant dense<0.000000e+00> : vector<1xf32>
    %44 = vector.multi_reduction <add>, %43, %cst_9 [1, 2] : vector<1x1x32xf32> to vector<1xf32>
    %45 = vector.shape_cast %44 : vector<1xf32> to vector<1x1x1xf32>
    %46 = vector.extract %45[0, 0, 0] : f32 from vector<1x1x1xf32>
    %c0_10 = arith.constant 0 : index
    %c0_11 = arith.constant 0 : index
    %47 = vector.load %arg3[%c0_10, %c0_11] : memref<3x32xf32, #tpu.memory_space<vmem>>, vector<1x32xf32>
    %c1_12 = arith.constant 1 : index
    %c0_13 = arith.constant 0 : index
    %48 = vector.load %arg3[%c1_12, %c0_13] : memref<3x32xf32, #tpu.memory_space<vmem>>, vector<1x32xf32>
    %c2_14 = arith.constant 2 : index
    %c0_15 = arith.constant 0 : index
    %49 = vector.load %arg3[%c2_14, %c0_15] : memref<3x32xf32, #tpu.memory_space<vmem>>, vector<1x32xf32>
    %50 = arith.maximumf %47, %48 : vector<1x32xf32>
    %51 = arith.maximumf %50, %49 : vector<1x32xf32>
    %52 = arith.subf %47, %51 : vector<1x32xf32>
    %53 = math.exp %52 : vector<1x32xf32>
    %54 = arith.subf %48, %51 : vector<1x32xf32>
    %55 = math.exp %54 : vector<1x32xf32>
    %56 = arith.addf %53, %55 : vector<1x32xf32>
    %57 = arith.subf %49, %51 : vector<1x32xf32>
    %58 = math.exp %57 : vector<1x32xf32>
    %59 = arith.addf %56, %58 : vector<1x32xf32>
    %60 = math.log %59 : vector<1x32xf32>
    %61 = arith.addf %60, %51 : vector<1x32xf32>
    %c0_16 = arith.constant 0 : index
    %c0_17 = arith.constant 0 : index
    %62 = vector.load %arg4[%c0_16, %c0_17] : memref<1x32xi32, #tpu.memory_space<vmem>>, vector<1x32xi32>
    %c1_i32_18 = arith.constant 1 : i32
    %63 = vector.broadcast %c1_i32_18 : i32 to vector<1x32xi32>
    %64 = arith.cmpi eq, %62, %63 : vector<1x32xi32>
    %65 = arith.select %64, %48, %49 : vector<1x32xi1>, vector<1x32xf32>
    %c0_i32_19 = arith.constant 0 : i32
    %66 = vector.broadcast %c0_i32_19 : i32 to vector<1x32xi32>
    %67 = arith.cmpi eq, %62, %66 : vector<1x32xi32>
    %68 = arith.select %67, %47, %65 : vector<1x32xi1>, vector<1x32xf32>
    %69 = arith.subf %61, %68 : vector<1x32xf32>
    %70 = tpu.iota {dimensions = array<i32: 1>} : vector<1x32xi32>
    %c32_i32_20 = arith.constant 32 : i32
    %71 = arith.muli %arg0, %c32_i32_20 : i32
    %72 = vector.broadcast %71 : i32 to vector<1x32xi32>
    %73 = arith.addi %72, %70 : vector<1x32xi32>
    %c-100_i32_21 = arith.constant -100 : i32
    %74 = vector.broadcast %c-100_i32_21 : i32 to vector<1x32xi32>
    %75 = arith.cmpi ne, %62, %74 : vector<1x32xi32>
    %c32_i32_22 = arith.constant 32 : i32
    %76 = vector.broadcast %c32_i32_22 : i32 to vector<1x32xi32>
    %77 = arith.cmpi slt, %73, %76 : vector<1x32xi32>
    %78 = arith.andi %75, %77 : vector<1x32xi1>
    %cst_23 = arith.constant 0.000000e+00 : f32
    %79 = vector.broadcast %cst_23 : f32 to vector<1x32xf32>
    %80 = arith.select %78, %69, %79 : vector<1x32xi1>, vector<1x32xf32>
    %81 = vector.shape_cast %80 : vector<1x32xf32> to vector<1x1x32xf32>
    %cst_24 = arith.constant dense<0.000000e+00> : vector<1xf32>
    %82 = vector.multi_reduction <add>, %81, %cst_24 [1, 2] : vector<1x1x32xf32> to vector<1xf32>
    %83 = vector.shape_cast %82 : vector<1xf32> to vector<1x1x1xf32>
    %84 = vector.extract %83[0, 0, 0] : f32 from vector<1x1x1xf32>
    %85 = arith.extui %78 : vector<1x32xi1> to vector<1x32xi32>
    %86 = arith.sitofp %85 : vector<1x32xi32> to vector<1x32xf32>
    %87 = vector.shape_cast %86 : vector<1x32xf32> to vector<1x1x32xf32>
    %cst_25 = arith.constant dense<0.000000e+00> : vector<1xf32>
    %88 = vector.multi_reduction <add>, %87, %cst_25 [1, 2] : vector<1x1x32xf32> to vector<1xf32>
    %89 = vector.shape_cast %88 : vector<1xf32> to vector<1x1x1xf32>
    %90 = vector.extract %89[0, 0, 0] : f32 from vector<1x1x1xf32>
    %c0_26 = arith.constant 0 : index
    %c0_27 = arith.constant 0 : index
    %91 = memref.load %arg8[%c0_26, %c0_27] : memref<1x8xf32, #tpu.memory_space<smem>>
    %92 = arith.addf %91, %40 : f32
    %c0_28 = arith.constant 0 : index
    %c0_29 = arith.constant 0 : index
    %93 = memref.load %arg8[%c0_28, %c0_29] : memref<1x8xf32, #tpu.memory_space<smem>>
    memref.store %92, %arg8[%c0_28, %c0_29] : memref<1x8xf32, #tpu.memory_space<smem>>
    %c0_30 = arith.constant 0 : index
    %c1_31 = arith.constant 1 : index
    %94 = memref.load %arg8[%c0_30, %c1_31] : memref<1x8xf32, #tpu.memory_space<smem>>
    %95 = arith.addf %94, %46 : f32
    %c0_32 = arith.constant 0 : index
    %c1_33 = arith.constant 1 : index
    %96 = memref.load %arg8[%c0_32, %c1_33] : memref<1x8xf32, #tpu.memory_space<smem>>
    memref.store %95, %arg8[%c0_32, %c1_33] : memref<1x8xf32, #tpu.memory_space<smem>>
    %c0_34 = arith.constant 0 : index
    %c2_35 = arith.constant 2 : index
    %97 = memref.load %arg8[%c0_34, %c2_35] : memref<1x8xf32, #tpu.memory_space<smem>>
    %98 = arith.addf %97, %84 : f32
    %c0_36 = arith.constant 0 : index
    %c2_37 = arith.constant 2 : index
    %99 = memref.load %arg8[%c0_36, %c2_37] : memref<1x8xf32, #tpu.memory_space<smem>>
    memref.store %98, %arg8[%c0_36, %c2_37] : memref<1x8xf32, #tpu.memory_space<smem>>
    %c0_38 = arith.constant 0 : index
    %c3 = arith.constant 3 : index
    %100 = memref.load %arg8[%c0_38, %c3] : memref<1x8xf32, #tpu.memory_space<smem>>
    %101 = arith.addf %100, %90 : f32
    %c0_39 = arith.constant 0 : index
    %c3_40 = arith.constant 3 : index
    %102 = memref.load %arg8[%c0_39, %c3_40] : memref<1x8xf32, #tpu.memory_space<smem>>
    memref.store %101, %arg8[%c0_39, %c3_40] : memref<1x8xf32, #tpu.memory_space<smem>>
    %c0_i32_41 = arith.constant 0 : i32
    %103 = arith.cmpi eq, %arg0, %c0_i32_41 : i32
    %104 = arith.extui %103 : i1 to i32
    %c0_i32_42 = arith.constant 0 : i32
    %105 = arith.cmpi ne, %104, %c0_i32_42 : i32
    scf.if %105 {
      %c0_43 = arith.constant 0 : index
      %c0_44 = arith.constant 0 : index
      %106 = memref.load %arg8[%c0_43, %c0_44] : memref<1x8xf32, #tpu.memory_space<smem>>
      %c0_45 = arith.constant 0 : index
      %c1_46 = arith.constant 1 : index
      %107 = memref.load %arg8[%c0_45, %c1_46] : memref<1x8xf32, #tpu.memory_space<smem>>
      %cst_47 = arith.constant 1.000000e+00 : f32
      %108 = arith.maximumf %107, %cst_47 : f32
      %109 = arith.divf %106, %108 : f32
      %c0_48 = arith.constant 0 : index
      %c2_49 = arith.constant 2 : index
      %110 = memref.load %arg8[%c0_48, %c2_49] : memref<1x8xf32, #tpu.memory_space<smem>>
      %c0_50 = arith.constant 0 : index
      %c3_51 = arith.constant 3 : index
      %111 = memref.load %arg8[%c0_50, %c3_51] : memref<1x8xf32, #tpu.memory_space<smem>>
      %cst_52 = arith.constant 1.000000e+00 : f32
      %112 = arith.maximumf %111, %cst_52 : f32
      %113 = arith.divf %110, %112 : f32
      %c0_53 = arith.constant 0 : index
      %c4 = arith.constant 4 : index
      %114 = memref.load %arg8[%c0_53, %c4] : memref<1x8xf32, #tpu.memory_space<smem>>
      %cst_54 = arith.constant 2.000000e+00 : f32
      %115 = arith.divf %114, %cst_54 : f32
      %c0_55 = arith.constant 0 : index
      %c0_56 = arith.constant 0 : index
      %116 = memref.load %arg7[%c0_55, %c0_56] : memref<1x3xf32, #tpu.memory_space<smem>>
      memref.store %109, %arg7[%c0_55, %c0_56] : memref<1x3xf32, #tpu.memory_space<smem>>
      %c0_57 = arith.constant 0 : index
      %c1_58 = arith.constant 1 : index
      %117 = memref.load %arg7[%c0_57, %c1_58] : memref<1x3xf32, #tpu.memory_space<smem>>
      memref.store %113, %arg7[%c0_57, %c1_58] : memref<1x3xf32, #tpu.memory_space<smem>>
      %c0_59 = arith.constant 0 : index
      %c2_60 = arith.constant 2 : index
      %118 = memref.load %arg7[%c0_59, %c2_60] : memref<1x3xf32, #tpu.memory_space<smem>>
      memref.store %115, %arg7[%c0_59, %c2_60] : memref<1x3xf32, #tpu.memory_space<smem>>
    } else {
    }
    return
  }
  func.func @transform_0(%arg0: i32) -> (i32, i32) {
    %c0_i32 = arith.constant 0 : i32
    %c0_i32_0 = arith.constant 0 : i32
    return %c0_i32, %arg0 : i32, i32
  }
  func.func @transform_1(%arg0: i32) -> (i32, i32) {
    %c0_i32 = arith.constant 0 : i32
    %c0_i32_0 = arith.constant 0 : i32
    return %c0_i32, %arg0 : i32, i32
  }
  func.func @transform_2(%arg0: i32) -> (i32, i32) {
    %c0_i32 = arith.constant 0 : i32
    %c0_i32_0 = arith.constant 0 : i32
    return %c0_i32, %arg0 : i32, i32
  }
  func.func @transform_3(%arg0: i32) -> (i32, i32) {
    %c0_i32 = arith.constant 0 : i32
    %c0_i32_0 = arith.constant 0 : i32
    return %c0_i32, %arg0 : i32, i32
  }
  func.func @transform_4(%arg0: i32) -> (i32, i32) {
    %c0_i32 = arith.constant 0 : i32
    %c0_i32_0 = arith.constant 0 : i32
    %c0_i32_1 = arith.constant 0 : i32
    return %c0_i32, %c0_i32_0 : i32, i32
  }
  func.func @transform_5(%arg0: i32) -> (i32, i32) {
    %c0_i32 = arith.constant 0 : i32
    %c0_i32_0 = arith.constant 0 : i32
    %c0_i32_1 = arith.constant 0 : i32
    return %c0_i32, %c0_i32_0 : i32, i32
  }
  func.func @transform_6(%arg0: i32) -> (i32, i32) {
    %c0_i32 = arith.constant 0 : i32
    %c0_i32_0 = arith.constant 0 : i32
    %c0_i32_1 = arith.constant 0 : i32
    return %c0_i32, %c0_i32_0 : i32, i32
  }
}

</mosaic_0001>

<llo_original>
// kernel: _absa_forward.1
$region0: #{_absa_forward.1}
  #allocation0 [shape = 'u32[]', space=smem, size = 0x4, offset = 0x4, fixed_abs, tag = 'smem constant byte address 0x4 - core index']
  #allocation1 [shape = 'u32[144,128]{1,0:T(1,128)}', space=vmem, size = 0x12000, scoped, tag = 'internal scratch']
  #allocation2 [shape = 'f32[1,8]{1,0:T(1,128)}', space=smem, size = 0x200, scoped, tag = 'scratch operand']
  %s0 = inlined_call_operand.vmem [shape: f32[3,32], index: 0, kind: input, shape index: {}]
  %s1 = inlined_call_operand.vmem [shape: s32[1,32], index: 1, kind: input, shape index: {}]
  %s2 = inlined_call_operand.vmem [shape: f32[3,32], index: 2, kind: input, shape index: {}]
  %s3 = inlined_call_operand.vmem [shape: s32[1,32], index: 3, kind: input, shape index: {}]
  %s4 = inlined_call_operand.vmem [shape: f32[3,2], index: 4, kind: input, shape index: {}]
  %s5 = inlined_call_operand.vmem [shape: s32[1,2], index: 5, kind: input, shape index: {}]
  %s6 = inlined_call_operand.vmem [shape: f32[1,3], index: 6, kind: output, shape index: {}]
  %s7 = sld [smem:[#allocation0]]
  $region42: #{_absa_forward.1} parent=0
    _
  %s9 = ssub.s32 1, %s7
  %s10 = scalar_select 0, %s9, %s7
  $region1: #{_absa_forward.1} parent=0
    #allocation3 [shape = 'u8[512]{0}', space=smem, size = 0x200, scoped, tag = 'output window, operand 0, single buffered']
    #allocation4 [shape = 's32[1]{0}', space=sflag, size = 0x4, scoped, tag = 'scoped memory for _absa_forward.1']
    %11 = vsyncpa [#allocation4], 0
    // Predicated region
    $region2: #{_absa_forward.1} parent=1 // pred_check
      _
    $region3: #{_absa_forward.1} parent=1 // pred_check_branch
      %13 = sbr.rel (0) target = $region5
    $region4: #{_absa_forward.1} parent=1 // pred_region
      _
    $region5: #{_absa_forward.1} parent=1 // pred_fallthru
      _
    // Predicated region
    $region6: #{_absa_forward.1} parent=1 // pred_check
      _
    $region7: #{_absa_forward.1} parent=1 // pred_check_branch
      %15 = sbr.rel (0) target = $region9
    $region8: #{_absa_forward.1} parent=1 // pred_region
      _
    $region9: #{_absa_forward.1} parent=1 // pred_fallthru
      _
    // Predicated region
    $region10: #{_absa_forward.1} parent=1 // pred_check
      _
    $region11: #{_absa_forward.1} parent=1 // pred_check_branch
      %17 = sbr.rel (0) target = $region13
    $region12: #{_absa_forward.1} parent=1 // pred_region
      _
    $region13: #{_absa_forward.1} parent=1 // pred_fallthru
      _
    // Predicated region
    $region14: #{_absa_forward.1} parent=1 // pred_check
      _
    $region15: #{_absa_forward.1} parent=1 // pred_check_branch
      %19 = sbr.rel (0) target = $region17
    $region16: #{_absa_forward.1} parent=1 // pred_region
      _
    $region17: #{_absa_forward.1} parent=1 // pred_fallthru
      _
    // Predicated region
    $region18: #{_absa_forward.1} parent=1 // pred_check
      _
    $region19: #{_absa_forward.1} parent=1 // pred_check_branch
      %21 = sbr.rel (0) target = $region21
    $region20: #{_absa_forward.1} parent=1 // pred_region
      _
    $region21: #{_absa_forward.1} parent=1 // pred_fallthru
      _
    // Predicated region
    $region22: #{_absa_forward.1} parent=1 // pred_check
      _
    $region23: #{_absa_forward.1} parent=1 // pred_check_branch
      %23 = sbr.rel (0) target = $region25
    $region24: #{_absa_forward.1} parent=1 // pred_region
      _
    $region25: #{_absa_forward.1} parent=1 // pred_fallthru
      _
    %p24 = scmp.eq.s32.totalorder 0, 0
    // Predicated region
    $region26: #{_absa_forward.1} parent=1 // pred_check
      %p25 = pneg %p24
    $region27: #{_absa_forward.1} parent=1 // pred_check_branch
      %27 = sbr.rel (%p25) target = $region29
    $region28: #{_absa_forward.1} parent=1 // pred_region
      %s28 = scalar_lea.smem [#allocation2], 0
      %29 = sst [smem:[%s28]] 0.0
      %s30 = scalar_lea.smem [#allocation2], 1
      %31 = sst [smem:[%s30]] 0.0
      %s32 = scalar_lea.smem [#allocation2], 2
      %33 = sst [smem:[%s32]] 0.0
      %s34 = scalar_lea.smem [#allocation2], 3
      %35 = sst [smem:[%s34]] 0.0
      %s36 = scalar_lea.smem [#allocation2], 4
      %37 = sst [smem:[%s36]] 0.0
      %s38 = scalar_lea.smem [#allocation2], 5
      %39 = sst [smem:[%s38]] 0.0
      %s40 = scalar_lea.smem [#allocation2], 6
      %41 = sst [smem:[%s40]] 0.0
      %s42 = scalar_lea.smem [#allocation2], 7
      %43 = sst [smem:[%s42]] 0.0
      %v44 = vld [vmem:[%s4] sm:$0x1]
      %v45 = vld [vmem:[%s4 + $0x1] sm:$0x1]
      %v46 = vld [vmem:[%s4 + $0x2] sm:$0x1]
      %v47 = vmax.f32 %v44, %v45
      %v48 = vmax.f32 %v47, %v46
      %v49 = vsub.f32 %v44, %v48
      %v50 = vmul.f32 %v49, 1.442695
      %v51 = vpow.pop %v50
      %v52 = vsub.f32 %v45, %v48
      %v53 = vmul.f32 %v52, 1.442695
      %v54 = vpow.pop %v53
      %v55 = vadd.f32 %v51, %v54
      %v56 = vsub.f32 %v46, %v48
      %v57 = vmul.f32 %v56, 1.442695
      %v58 = vpow.pop %v57
      %v59 = vadd.f32 %v55, %v58
      %v60 = vlog2.pop %v59
      %v61 = vmul.f32 %v60, 0.6931472
      %v62 = vadd.f32 %v61, %v48
      %v63 = vld [vmem:[%s5] sm:$0x1]
      %vm64 = vcmp.eq.s32.totalorder %v63, 1
      %v65 = vsel %vm64, %v45, %v46
      %vm66 = vcmp.eq.s32.totalorder %v63, 0
      %v67 = vsel %vm66, %v44, %v65
      %v68 = vsub.f32 %v62, %v67
      %v69 = vsub.f32 0.0, %v68
      %v70 = vmul.f32 %v69, 1.442695
      %v71 = vpow.pop %v70
      %v72 = vsub.f32 1.0, %v71
      %v73 = vmax.f32 %v72, 0.0
      %v74 = vmul.f32 %v73, %v73
      %v75 = vmul.f32 %v74, %v68
      %vm76 = vcmask 8192
      %v77 = vsel %vm76, %v75, 0.0
      %78 = vadd.xlane.f32.xlu0 %v77
      %v79 = vpop.xlane.xlu0 %78
      %v80 = vrot.slane %v79, 4
      %v81 = vadd.f32 %v79, %v80
      %v82 = vrot.slane %v81, 2
      %v83 = vadd.f32 %v81, %v82
      %v84 = vrot.slane %v83, 1
      %v85 = vadd.f32 %v83, %v84
      %s86 = vtos %v85
      %87 = sst [smem:[%s36]] %s86
    $region29: #{_absa_forward.1} parent=1 // pred_fallthru
      _
    %v88 = vld [vmem:[%s0] sm:$0x1]
    %v89 = vld [vmem:[%s0 + $0x1] sm:$0x1]
    %v90 = vld [vmem:[%s0 + $0x2] sm:$0x1]
    %v91 = vmax.f32 %v88, %v89
    %v92 = vmax.f32 %v91, %v90
    %v93 = vsub.f32 %v88, %v92
    %v94 = vmul.f32 %v93, 1.442695
    %v95 = vpow.pop %v94
    %v96 = vsub.f32 %v89, %v92
    %v97 = vmul.f32 %v96, 1.442695
    %v98 = vpow.pop %v97
    %v99 = vadd.f32 %v95, %v98
    %v100 = vsub.f32 %v90, %v92
    %v101 = vmul.f32 %v100, 1.442695
    %v102 = vpow.pop %v101
    %v103 = vadd.f32 %v99, %v102
    %v104 = vlog2.pop %v103
    %v105 = vmul.f32 %v104, 0.6931472
    %v106 = vadd.f32 %v105, %v92
    %v107 = vld [vmem:[%s1] sm:$0x1]
    %vm108 = vcmp.eq.s32.totalorder %v107, 1
    %v109 = vsel %vm108, %v89, %v90
    %vm110 = vcmp.eq.s32.totalorder %v107, 0
    %v111 = vsel %vm110, %v88, %v109
    %v112 = vsub.f32 %v106, %v111
    %v113 = vlaneseq
    %v114 = vand.u32 %v113, 127
    %s115 = smul.u32 0, 32
    %v116 = vstv %s115
    %v117 = vadd.s32 %v116, %v114
    %vm118 = vcmp.ne.s32.totalorder %v107, 4294967196
    %vm119 = vcmp.lt.s32.totalorder %v117, 32
    %vm120 = vmand %vm118, %vm119
    %v121 = vsel %vm120, %v112, 0.0
    %vm122 = vcmask 253952
    %v123 = vsel %vm122, %v121, 0.0
    %124 = vadd.xlane.f32.xlu0 %v123
    %v125 = vpop.xlane.xlu0 %124
    %v126 = vrot.slane %v125, 4
    %v127 = vadd.f32 %v125, %v126
    %v128 = vrot.slane %v127, 2
    %v129 = vadd.f32 %v127, %v128
    %v130 = vrot.slane %v129, 1
    %v131 = vadd.f32 %v129, %v130
    %s132 = vtos %v131
    %v133 = vsel %vm120, 1, 0
    %v134 = vcvt.s32.f32 %v133
    %v135 = vsel %vm122, %v134, 0.0
    %136 = vadd.xlane.f32.xlu0 %v135
    %v137 = vpop.xlane.xlu0 %136
    %v138 = vrot.slane %v137, 4
    %v139 = vadd.f32 %v137, %v138
    %v140 = vrot.slane %v139, 2
    %v141 = vadd.f32 %v139, %v140
    %v142 = vrot.slane %v141, 1
    %v143 = vadd.f32 %v141, %v142
    %s144 = vtos %v143
    %v145 = vld [vmem:[%s2] sm:$0x1]
    %v146 = vld [vmem:[%s2 + $0x1] sm:$0x1]
    %v147 = vld [vmem:[%s2 + $0x2] sm:$0x1]
    %v148 = vmax.f32 %v145, %v146
    %v149 = vmax.f32 %v148, %v147
    %v150 = vsub.f32 %v145, %v149
    %v151 = vmul.f32 %v150, 1.442695
    %v152 = vpow.pop %v151
    %v153 = vsub.f32 %v146, %v149
    %v154 = vmul.f32 %v153, 1.442695
    %v155 = vpow.pop %v154
    %v156 = vadd.f32 %v152, %v155
    %v157 = vsub.f32 %v147, %v149
    %v158 = vmul.f32 %v157, 1.442695
    %v159 = vpow.pop %v158
    %v160 = vadd.f32 %v156, %v159
    %v161 = vlog2.pop %v160
    %v162 = vmul.f32 %v161, 0.6931472
    %v163 = vadd.f32 %v162, %v149
    %v164 = vld [vmem:[%s3] sm:$0x1]
    %vm165 = vcmp.eq.s32.totalorder %v164, 1
    %v166 = vsel %vm165, %v146, %v147
    %vm167 = vcmp.eq.s32.totalorder %v164, 0
    %v168 = vsel %vm167, %v145, %v166
    %v169 = vsub.f32 %v163, %v168
    %vm170 = vcmp.ne.s32.totalorder %v164, 4294967196
    %vm171 = vmand %vm170, %vm119
    %v172 = vsel %vm171, %v169, 0.0
    %v173 = vsel %vm122, %v172, 0.0
    %174 = vadd.xlane.f32.xlu0 %v173
    %v175 = vpop.xlane.xlu0 %174
    %v176 = vrot.slane %v175, 4
    %v177 = vadd.f32 %v175, %v176
    %v178 = vrot.slane %v177, 2
    %v179 = vadd.f32 %v177, %v178
    %v180 = vrot.slane %v179, 1
    %v181 = vadd.f32 %v179, %v180
    %s182 = vtos %v181
    %v183 = vsel %vm171, 1, 0
    %v184 = vcvt.s32.f32 %v183
    %v185 = vsel %vm122, %v184, 0.0
    %186 = vadd.xlane.f32.xlu0 %v185
    %v187 = vpop.xlane.xlu0 %186
    %v188 = vrot.slane %v187, 4
    %v189 = vadd.f32 %v187, %v188
    %v190 = vrot.slane %v189, 2
    %v191 = vadd.f32 %v189, %v190
    %v192 = vrot.slane %v191, 1
    %v193 = vadd.f32 %v191, %v192
    %s194 = vtos %v193
    %s195 = sld [smem:[#allocation2]]
    %s196 = sadd.f32 %s195, %s132
    %s197 = scalar_lea.smem [#allocation2], 0
    %198 = sst [smem:[%s197]] %s196
    %s199 = sld [smem:[#allocation2 + $0x1]]
    %s200 = sadd.f32 %s199, %s144
    %s201 = scalar_lea.smem [#allocation2], 1
    %202 = sst [smem:[%s201]] %s200
    %s203 = sld [smem:[#allocation2 + $0x2]]
    %s204 = sadd.f32 %s203, %s182
    %s205 = scalar_lea.smem [#allocation2], 2
    %206 = sst [smem:[%s205]] %s204
    %s207 = sld [smem:[#allocation2 + $0x3]]
    %s208 = sadd.f32 %s207, %s194
    %s209 = scalar_lea.smem [#allocation2], 3
    %210 = sst [smem:[%s209]] %s208
    // Predicated region
    $region30: #{_absa_forward.1} parent=1 // pred_check
      %p211 = pneg %p24
    $region31: #{_absa_forward.1} parent=1 // pred_check_branch
      %213 = sbr.rel (%p211) target = $region33
    $region32: #{_absa_forward.1} parent=1 // pred_region
      %s214 = sld [smem:[#allocation2]]
      %s215 = sld [smem:[#allocation2 + $0x1]]
      %s216 = smax.f32 %s215, 1.0
      %v217 = vstv %s216
      %v218 = vrcp.pop %v217
      %s219 = vtos %v218
      %s220 = smul.f32 %s214, %s219
      %s221 = sld [smem:[#allocation2 + $0x2]]
      %s222 = sld [smem:[#allocation2 + $0x3]]
      %s223 = smax.f32 %s222, 1.0
      %v224 = vstv %s223
      %v225 = vrcp.pop %v224
      %s226 = vtos %v225
      %s227 = smul.f32 %s221, %s226
      %s228 = sld [smem:[#allocation2 + $0x4]]
      %v229 = vrcp.pop 2.0
      %s230 = vtos %v229
      %s231 = smul.f32 %s228, %s230
      %s232 = scalar_lea.smem [#allocation3], 0
      %233 = sst [smem:[%s232]] %s220
      %s234 = scalar_lea.smem [#allocation3], 1
      %235 = sst [smem:[%s234]] %s227
      %s236 = scalar_lea.smem [#allocation3], 2
      %237 = sst [smem:[%s236]] %s231
    $region33: #{_absa_forward.1} parent=1 // pred_fallthru
      _
    // Predicated region
    $region34: #{_absa_forward.1} parent=1 // pred_check
      _
    $region35: #{_absa_forward.1} parent=1 // pred_check_branch
      %239 = sbr.rel (0) target = $region37
    $region36: #{_absa_forward.1} parent=1 // pred_region
      %s241 = ssub.s32 16, 16
      %242 = vsyncadd [#allocation4], %s241
      %s244 = sshll.u32 %s6, 4
      %s245 = int_to_ptr.vmem [resolvable:$true] %s244
      %247 = dma.smem_to_vmem [#allocation3], 16, %s245, [#allocation4]
    $region37: #{_absa_forward.1} parent=1 // pred_fallthru
      _
    // Predicated region
    $region38: #{_absa_forward.1} parent=1 // pred_check
      _
    $region39: #{_absa_forward.1} parent=1 // pred_check_branch
      %249 = sbr.rel (0) target = $region41
    $region40: #{_absa_forward.1} parent=1 // pred_region
      %250 = dma.done [#allocation4], 16
    $region41: #{_absa_forward.1} parent=1 // pred_fallthru
      _
    %251 = sfence
    %252 = vsyncpa [#allocation4], 1

</llo_original>
